<compile_context>
chip_gen: v7x
topology: tpu7x:2x2x1
jax: 0.10.0
libtpu: 0.0.40
codegen_flags: <defaults>
</compile_context>

<pallas_src>
import functools

import jax
import jax.numpy as jnp
from jax.experimental import pallas as pl
from jax.experimental.pallas import tpu as pltpu


HIDDEN = 128
N_HIDDEN = 3
IN_FEATURES = 1
OUT_FEATURES = 1
LEAKY_SLOPE = 0.02  # matches nn.LeakyReLU(negative_slope=0.02)


def _leaky_relu(h, slope=LEAKY_SLOPE):
    # Bit-identical to where(h>0, h, slope*h) for 0 < slope < 1, but only
    # 2 VALU ops (mul + max) instead of 3 (cmp + mul + select).
    return jnp.maximum(h, slope * h)


def discriminator_kernel(x_ref,
                         w1_ref, b1_ref,
                         w2_ref, b2_ref,
                         w3_ref, b3_ref,
                         w4_ref, b4_ref,
                         o_ref,
                         *, compute_dtype):
    """Feature-major tile: x_ref [1, TB], o_ref [1, TB].

    w1 is [128, 1] f32 (VPU outer product), b* are [out, 1] f32,
    w2/w3 are [128, 128] in `compute_dtype`, w4 is a [1, 128] row in
    `compute_dtype` (MXU head).
    """
    x = x_ref[...]                                         # [1, TB] f32

    # Layer 1 (K = 1): outer product -> VPU broadcast FMA, no MXU pass.
    h = w1_ref[...] * x + b1_ref[...]                      # [128,1]*[1,TB] -> [128,TB]
    h = _leaky_relu(h)

    # Layer 2: 128x128 contraction on the MXU, f32 accumulation.
    h = jnp.dot(w2_ref[...], h.astype(compute_dtype),
                preferred_element_type=jnp.float32) + b2_ref[...]
    h = _leaky_relu(h)

    # Layer 3: 128x128 contraction on the MXU.
    h = jnp.dot(w3_ref[...], h.astype(compute_dtype),
                preferred_element_type=jnp.float32) + b3_ref[...]
    h = _leaky_relu(h)

    # Layer 4 (N = 1): offloaded to the (idle) MXU as [1,128] x [128,TB].
    logits = jnp.dot(w4_ref[...], h.astype(compute_dtype),
                     preferred_element_type=jnp.float32) + b4_ref[...]  # [1, TB]

    # Sigmoid: EUP exp + exact reciprocal (matches the f32 reference at 1e-5).
    o_ref[...] = pl.reciprocal(1.0 + jnp.exp(-logits), approx=False)


def _round_up(x, m):
    return ((x + m - 1) // m) * m


def discriminator_forward(x, params, *, tb=None, matmul_dtype=jnp.bfloat16):
    """x: [B, 1] float32 -> [B, 1] float32 in (0, 1).

    tb: batch tile (lane) width per grid step; multiple of 128.  Default is
        adaptive: ~B/4 per step (>= 2 steps for v7x's 2 TCs), capped at 4096.
    matmul_dtype: dtype fed to the MXU matmuls (bf16 default, MXU-native on
        every generation); accumulation and all VPU/EUP math stay f32.
    """
    B = x.shape[0]
    if tb is None:
        # Aim for ~4 grid steps (>=2 so v7x's two TensorCores both get work),
        # but never below one lane-group or above 4096 lanes per tile.
        tb = min(4096, max(128, _round_up(pl.cdiv(B, 4), 128)))
    assert tb % 128 == 0, "batch tile must be lane-dense (multiple of 128)"
    # Beyond ~8192 the f32 intermediates ([128, tb]) start colliding with
    # v7x's scoped-VMEM default; keep the cap instead of raising the limit.
    assert tb <= 8192, "cap tb (or set vmem_limit_bytes) for v7x VMEM"

    (w1, b1), (w2, b2), (w3, b3), (w4, b4) = params

    # Re-layout / pre-cast weights once in the wrapper (tiny tensors, and the
    # per-step in-kernel weight casts were pure VALU waste).
    w1t, b1t = w1.T, b1.T                                  # [128, 1], [128, 1] f32
    w2t, b2t = w2.T.astype(matmul_dtype), b2.T             # [128, 128], [128, 1]
    w3t, b3t = w3.T.astype(matmul_dtype), b3.T             # [128, 128], [128, 1]
    w4r, b4c = w4.T.astype(matmul_dtype), b4               # [1, 128] row, [1, 1]

    xt = x.T                                               # [1, B] (batch on lanes)
    n_steps = pl.cdiv(B, tb)
    b_pad = n_steps * tb
    if b_pad != B:
        xt = jnp.pad(xt, ((0, 0), (0, b_pad - B)))

    const = lambda i: (0, 0)        # weights/biases: VMEM-resident, no re-DMA

    grid_spec = pltpu.PrefetchScalarGridSpec(
        num_scalar_prefetch=0,
        grid=(n_steps,),
        in_specs=[
            pl.BlockSpec((1, tb), lambda i: (0, i)),        # x tile
            pl.BlockSpec((HIDDEN, 1), const),               # w1
            pl.BlockSpec((HIDDEN, 1), const),               # b1
            pl.BlockSpec((HIDDEN, HIDDEN), const),          # w2
            pl.BlockSpec((HIDDEN, 1), const),               # b2
            pl.BlockSpec((HIDDEN, HIDDEN), const),          # w3
            pl.BlockSpec((HIDDEN, 1), const),               # b3
            pl.BlockSpec((1, HIDDEN), const),               # w4 (row, MXU head)
            pl.BlockSpec((1, 1), const),                    # b4
        ],
        out_specs=pl.BlockSpec((1, tb), lambda i: (0, i)),
    )

    n_param = sum(int(w.size) + int(b.size) for (w, b) in params)
    cost = pl.CostEstimate(
        flops=2 * b_pad * (IN_FEATURES * HIDDEN
                           + HIDDEN * HIDDEN * 2
                           + HIDDEN * OUT_FEATURES),
        transcendentals=b_pad,  # one exp per output element
        bytes_accessed=4 * (b_pad * (IN_FEATURES + OUT_FEATURES) + n_param),
    )

    kernel = functools.partial(discriminator_kernel, compute_dtype=matmul_dtype)

    out_t = pl.pallas_call(
        kernel,
        out_shape=jax.ShapeDtypeStruct((1, b_pad), jnp.float32),
        grid_spec=grid_spec,
        compiler_params=pltpu.CompilerParams(
            dimension_semantics=("parallel",)),
        cost_estimate=cost,
    )(xt, w1t, b1t, w2t, b2t, w3t, b3t, w4r, b4c)

    return out_t[:, :B].T          # back to [B, 1]


def init_params(key):
    """Deterministic init mimicking PyTorch's default Linear init:
    U(-1/sqrt(fan_in), 1/sqrt(fan_in)) for both weight and bias.
    Stored batch-major-friendly as w [in, out], b [1, out] (so the pure-JAX
    reference is simply x @ w + b); the Pallas wrapper re-lays them out."""
    dims = [IN_FEATURES] + [HIDDEN] * N_HIDDEN + [OUT_FEATURES]
    params = []
    for i in range(len(dims) - 1):
        fan_in, fan_out = dims[i], dims[i + 1]
        key, kw, kb = jax.random.split(key, 3)
        bound = 1.0 / (fan_in ** 0.5)
        w = jax.random.uniform(kw, (fan_in, fan_out), jnp.float32,
                               minval=-bound, maxval=bound)
        b = jax.random.uniform(kb, (1, fan_out), jnp.float32,
                               minval=-bound, maxval=bound)
        params.append((w, b))
    return params


def reference_forward(x, params):
    """Pure-JAX reference (batch-major, f32)."""
    h = x
    for i, (w, b) in enumerate(params):
        h = h @ w + b
        if i < len(params) - 1:
            h = jnp.where(h > 0, h, LEAKY_SLOPE * h)
    return 1.0 / (1.0 + jnp.exp(-h))


if __name__ == "__main__":
    key = jax.random.PRNGKey(0)
    kp, kx = jax.random.split(key)
    params = init_params(kp)

    # Small batch: single 128-wide lane tile (adaptive tb), f32 + bf16 paths.
    B = 8
    x = jax.random.normal(kx, (B, IN_FEATURES), jnp.float32)
    ref = reference_forward(x, params)

    out_f32 = jax.block_until_ready(
        discriminator_forward(x, params, matmul_dtype=jnp.float32))
    assert out_f32.shape == (B, OUT_FEATURES)
    assert jnp.allclose(out_f32, ref, atol=1e-5, rtol=1e-5), (out_f32, ref)

    out_bf16 = jax.block_until_ready(discriminator_forward(x, params))
    assert jnp.allclose(out_bf16, ref, atol=2e-2, rtol=2e-2)

    # Non-multiple batch: exercises multi-step grid + padding path.
    B2 = 700
    x2 = jax.random.normal(jax.random.PRNGKey(1), (B2, IN_FEATURES), jnp.float32)
    ref2 = reference_forward(x2, params)

    out2_f32 = jax.block_until_ready(
        discriminator_forward(x2, params, matmul_dtype=jnp.float32))
    assert out2_f32.shape == (B2, OUT_FEATURES)
    assert jnp.allclose(out2_f32, ref2, atol=1e-5, rtol=1e-5)

    # Default bf16-at-the-dot MXU path (f32 accumulation), looser check.
    out2_bf16 = jax.block_until_ready(discriminator_forward(x2, params))
    assert jnp.allclose(out2_bf16, ref2, atol=2e-2, rtol=2e-2)

    # Explicit large tile (single step, heavy padding) still correct.
    out2_big = jax.block_until_ready(
        discriminator_forward(x2, params, tb=2048, matmul_dtype=jnp.float32))
    assert jnp.allclose(out2_big, ref2, atol=1e-5, rtol=1e-5)

    print("KERNEL_OK")
</pallas_src>

<mosaic_0001>
module attributes {stable_mosaic.version = 11 : i64} {
  func.func @discriminator_kernel(%arg0: i32, %arg1: memref<1x128xf32, #tpu.memory_space<vmem>>, %arg2: memref<128x1xf32, #tpu.memory_space<vmem>>, %arg3: memref<128x1xf32, #tpu.memory_space<vmem>>, %arg4: memref<128x128xf32, #tpu.memory_space<vmem>>, %arg5: memref<128x1xf32, #tpu.memory_space<vmem>>, %arg6: memref<128x128xf32, #tpu.memory_space<vmem>>, %arg7: memref<128x1xf32, #tpu.memory_space<vmem>>, %arg8: memref<1x128xf32, #tpu.memory_space<vmem>>, %arg9: memref<1x1xf32, #tpu.memory_space<vmem>>, %arg10: memref<1x128xf32, #tpu.memory_space<vmem>>) attributes {dimension_semantics = [#tpu.dimension_semantics<parallel>], iteration_bounds = array<i64: 1>, scalar_prefetch = 0 : i64, scratch_operands = 0 : i64, tpu.core_type = #tpu.core_type<tc>, window_params = [{transform_indices = @transform_0, window_bounds = array<i64: 1, 128>}, {pipeline_mode = #tpu.pipeline_mode<synchronous>, transform_indices = @transform_1, window_bounds = array<i64: 128, 1>}, {pipeline_mode = #tpu.pipeline_mode<synchronous>, transform_indices = @transform_2, window_bounds = array<i64: 128, 1>}, {pipeline_mode = #tpu.pipeline_mode<synchronous>, transform_indices = @transform_3, window_bounds = array<i64: 128, 128>}, {pipeline_mode = #tpu.pipeline_mode<synchronous>, transform_indices = @transform_4, window_bounds = array<i64: 128, 1>}, {pipeline_mode = #tpu.pipeline_mode<synchronous>, transform_indices = @transform_5, window_bounds = array<i64: 128, 128>}, {pipeline_mode = #tpu.pipeline_mode<synchronous>, transform_indices = @transform_6, window_bounds = array<i64: 128, 1>}, {pipeline_mode = #tpu.pipeline_mode<synchronous>, transform_indices = @transform_7, window_bounds = array<i64: 1, 128>}, {pipeline_mode = #tpu.pipeline_mode<synchronous>, transform_indices = @transform_8, window_bounds = array<i64: 1, 1>}, {transform_indices = @transform_9, window_bounds = array<i64: 1, 128>}]} {
    %c0 = arith.constant 0 : index
    %c0_0 = arith.constant 0 : index
    %0 = vector.load %arg1[%c0, %c0_0] : memref<1x128xf32, #tpu.memory_space<vmem>>, vector<1x128xf32>
    %c0_1 = arith.constant 0 : index
    %c0_2 = arith.constant 0 : index
    %1 = vector.load %arg2[%c0_1, %c0_2] : memref<128x1xf32, #tpu.memory_space<vmem>>, vector<128x1xf32>
    %2 = vector.broadcast %1 : vector<128x1xf32> to vector<128x128xf32>
    %3 = vector.broadcast %0 : vector<1x128xf32> to vector<128x128xf32>
    %4 = arith.mulf %2, %3 : vector<128x128xf32>
    %c0_3 = arith.constant 0 : index
    %c0_4 = arith.constant 0 : index
    %5 = vector.load %arg3[%c0_3, %c0_4] : memref<128x1xf32, #tpu.memory_space<vmem>>, vector<128x1xf32>
    %6 = vector.broadcast %5 : vector<128x1xf32> to vector<128x128xf32>
    %7 = arith.addf %4, %6 : vector<128x128xf32>
    %cst = arith.constant 2.000000e-02 : f32
    %8 = vector.broadcast %cst : f32 to vector<128x128xf32>
    %9 = arith.mulf %8, %7 : vector<128x128xf32>
    %10 = arith.maximumf %7, %9 : vector<128x128xf32>
    %c0_5 = arith.constant 0 : index
    %c0_6 = arith.constant 0 : index
    %11 = vector.load %arg4[%c0_5, %c0_6] : memref<128x128xf32, #tpu.memory_space<vmem>>, vector<128x128xf32>
    %cst_7 = arith.constant dense<0.000000e+00> : vector<128x128xf32>
    %12 = tpu.matmul %11, %10, %cst_7 {dimension_numbers = #tpu.dot_dimension_numbers<[1], [0], [0], [1], [0, 0, 1, 1], [], []>} : vector<128x128xf32>, vector<128x128xf32>, vector<128x128xf32> -> vector<128x128xf32>
    %c0_8 = arith.constant 0 : index
    %c0_9 = arith.constant 0 : index
    %13 = vector.load %arg5[%c0_8, %c0_9] : memref<128x1xf32, #tpu.memory_space<vmem>>, vector<128x1xf32>
    %14 = vector.broadcast %13 : vector<128x1xf32> to vector<128x128xf32>
    %15 = arith.addf %12, %14 : vector<128x128xf32>
    %cst_10 = arith.constant 2.000000e-02 : f32
    %16 = vector.broadcast %cst_10 : f32 to vector<128x128xf32>
    %17 = arith.mulf %16, %15 : vector<128x128xf32>
    %18 = arith.maximumf %15, %17 : vector<128x128xf32>
    %c0_11 = arith.constant 0 : index
    %c0_12 = arith.constant 0 : index
    %19 = vector.load %arg6[%c0_11, %c0_12] : memref<128x128xf32, #tpu.memory_space<vmem>>, vector<128x128xf32>
    %cst_13 = arith.constant dense<0.000000e+00> : vector<128x128xf32>
    %20 = tpu.matmul %19, %18, %cst_13 {dimension_numbers = #tpu.dot_dimension_numbers<[1], [0], [0], [1], [0, 0, 1, 1], [], []>} : vector<128x128xf32>, vector<128x128xf32>, vector<128x128xf32> -> vector<128x128xf32>
    %c0_14 = arith.constant 0 : index
    %c0_15 = arith.constant 0 : index
    %21 = vector.load %arg7[%c0_14, %c0_15] : memref<128x1xf32, #tpu.memory_space<vmem>>, vector<128x1xf32>
    %22 = vector.broadcast %21 : vector<128x1xf32> to vector<128x128xf32>
    %23 = arith.addf %20, %22 : vector<128x128xf32>
    %cst_16 = arith.constant 2.000000e-02 : f32
    %24 = vector.broadcast %cst_16 : f32 to vector<128x128xf32>
    %25 = arith.mulf %24, %23 : vector<128x128xf32>
    %26 = arith.maximumf %23, %25 : vector<128x128xf32>
    %c0_17 = arith.constant 0 : index
    %c0_18 = arith.constant 0 : index
    %27 = vector.load %arg8[%c0_17, %c0_18] : memref<1x128xf32, #tpu.memory_space<vmem>>, vector<1x128xf32>
    %cst_19 = arith.constant dense<0.000000e+00> : vector<1x128xf32>
    %28 = tpu.matmul %27, %26, %cst_19 {dimension_numbers = #tpu.dot_dimension_numbers<[1], [0], [0], [1], [0, 0, 1, 1], [], []>} : vector<1x128xf32>, vector<128x128xf32>, vector<1x128xf32> -> vector<1x128xf32>
    %c0_20 = arith.constant 0 : index
    %c0_21 = arith.constant 0 : index
    %29 = vector.load %arg9[%c0_20, %c0_21] : memref<1x1xf32, #tpu.memory_space<vmem>>, vector<1x1xf32>
    %30 = vector.broadcast %29 : vector<1x1xf32> to vector<1x128xf32>
    %31 = arith.addf %28, %30 : vector<1x128xf32>
    %cst_22 = arith.constant 0.000000e+00 : f32
    %32 = vector.broadcast %cst_22 : f32 to vector<1x128xf32>
    %33 = arith.subf %32, %31 : vector<1x128xf32>
    %34 = math.exp %33 : vector<1x128xf32>
    %cst_23 = arith.constant 1.000000e+00 : f32
    %35 = vector.broadcast %cst_23 : f32 to vector<1x128xf32>
    %36 = arith.addf %35, %34 : vector<1x128xf32>
    %37 = tpu.reciprocal %36 : vector<1x128xf32> -> vector<1x128xf32>
    %c0_24 = arith.constant 0 : index
    %c0_25 = arith.constant 0 : index
    %38 = vector.load %arg10[%c0_24, %c0_25] : memref<1x128xf32, #tpu.memory_space<vmem>>, vector<1x128xf32>
    tpu.vector_store %arg10[%c0_24, %c0_25], %37 {strides = array<i32>} : memref<1x128xf32, #tpu.memory_space<vmem>>, vector<1x128xf32>,
    return
  }
  func.func @transform_0(%arg0: i32) -> (i32, i32) {
    %c0_i32 = arith.constant 0 : i32
    %c0_i32_0 = arith.constant 0 : i32
    return %c0_i32, %arg0 : i32, i32
  }
  func.func @transform_1(%arg0: i32) -> (i32, i32) {
    %c0_i32 = arith.constant 0 : i32
    %c0_i32_0 = arith.constant 0 : i32
    %c0_i32_1 = arith.constant 0 : i32
    return %c0_i32, %c0_i32_0 : i32, i32
  }
  func.func @transform_2(%arg0: i32) -> (i32, i32) {
    %c0_i32 = arith.constant 0 : i32
    %c0_i32_0 = arith.constant 0 : i32
    %c0_i32_1 = arith.constant 0 : i32
    return %c0_i32, %c0_i32_0 : i32, i32
  }
  func.func @transform_3(%arg0: i32) -> (i32, i32) {
    %c0_i32 = arith.constant 0 : i32
    %c0_i32_0 = arith.constant 0 : i32
    %c0_i32_1 = arith.constant 0 : i32
    return %c0_i32, %c0_i32_0 : i32, i32
  }
  func.func @transform_4(%arg0: i32) -> (i32, i32) {
    %c0_i32 = arith.constant 0 : i32
    %c0_i32_0 = arith.constant 0 : i32
    %c0_i32_1 = arith.constant 0 : i32
    return %c0_i32, %c0_i32_0 : i32, i32
  }
  func.func @transform_5(%arg0: i32) -> (i32, i32) {
    %c0_i32 = arith.constant 0 : i32
    %c0_i32_0 = arith.constant 0 : i32
    %c0_i32_1 = arith.constant 0 : i32
    return %c0_i32, %c0_i32_0 : i32, i32
  }
  func.func @transform_6(%arg0: i32) -> (i32, i32) {
    %c0_i32 = arith.constant 0 : i32
    %c0_i32_0 = arith.constant 0 : i32
    %c0_i32_1 = arith.constant 0 : i32
    return %c0_i32, %c0_i32_0 : i32, i32
  }
  func.func @transform_7(%arg0: i32) -> (i32, i32) {
    %c0_i32 = arith.constant 0 : i32
    %c0_i32_0 = arith.constant 0 : i32
    %c0_i32_1 = arith.constant 0 : i32
    return %c0_i32, %c0_i32_0 : i32, i32
  }
  func.func @transform_8(%arg0: i32) -> (i32, i32) {
    %c0_i32 = arith.constant 0 : i32
    %c0_i32_0 = arith.constant 0 : i32
    %c0_i32_1 = arith.constant 0 : i32
    return %c0_i32, %c0_i32_0 : i32, i32
  }
  func.func @transform_9(%arg0: i32) -> (i32, i32) {
    %c0_i32 = arith.constant 0 : i32
    %c0_i32_0 = arith.constant 0 : i32
    return %c0_i32, %arg0 : i32, i32
  }
}

</mosaic_0001>

<llo_original>
// kernel: tpu_custom_call.1
$region0: #{tpu_custom_call.1}
  #allocation0 [shape = 'u32[]', space=smem, size = 0x4, offset = 0x4, fixed_abs, tag = 'smem constant byte address 0x4 - core index']
  #allocation1 [shape = 'u32[144,128]{1,0:T(1,128)}', space=vmem, size = 0x12000, scoped, tag = 'internal scratch']
  #allocation2 [shape = 'f32[1,1]{1,0:T(1,128)S(1)}', space=vmem, size = 0x200, scoped, tag = 'scoped memory for tpu_custom_call.1']
  %s0 = inlined_call_operand.vmem [shape: f32[1,128], index: 0, kind: input, shape index: {}]
  %s1 = inlined_call_operand.vmem [shape: f32[128,1], index: 1, kind: input, shape index: {}]
  %s2 = inlined_call_operand.vmem [shape: f32[128,1], index: 2, kind: input, shape index: {}]
  %s3 = inlined_call_operand.vmem [shape: f32[128,128], index: 3, kind: input, shape index: {}]
  %s4 = inlined_call_operand.vmem [shape: f32[128,1], index: 4, kind: input, shape index: {}]
  %s5 = inlined_call_operand.vmem [shape: f32[128,128], index: 5, kind: input, shape index: {}]
  %s6 = inlined_call_operand.vmem [shape: f32[128,1], index: 6, kind: input, shape index: {}]
  %s7 = inlined_call_operand.vmem [shape: f32[1,128], index: 7, kind: input, shape index: {}]
  %s8 = inlined_call_operand.<no memory space> [shape: f32[1,1], index: 8, kind: input, shape index: {}]
  %s9 = inlined_call_operand.hbm [shape: f32[1,128], index: 9, kind: output, shape index: {}]
  %s10 = sld [smem:[#allocation0]]
  $region46: #{tpu_custom_call.1} parent=0
    _
  %s12 = ssub.s32 1, %s10
  %s13 = scalar_select 0, %s12, %s10
  %v14 = vstv %s8
  %15 = vst [vmem:[#allocation2] sm:$0x1] %v14
  $region1: #{tpu_custom_call.1} parent=0
    #allocation3 [shape = 'u8[512]{0}', space=vmem, size = 0x400, scoped, tag = 'output window, operand 0, single buffered']
    #allocation4 [shape = 's32[1]{0}', space=sflag, size = 0x4, scoped, tag = 'scoped memory for tpu_custom_call.1']
    %16 = vsyncpa [#allocation4], 0
    // Predicated region
    $region2: #{tpu_custom_call.1} parent=1 // pred_check
      _
    $region3: #{tpu_custom_call.1} parent=1 // pred_check_branch
      %18 = sbr.rel (0) target = $region5
    $region4: #{tpu_custom_call.1} parent=1 // pred_region
      _
    $region5: #{tpu_custom_call.1} parent=1 // pred_fallthru
      _
    // Predicated region
    $region6: #{tpu_custom_call.1} parent=1 // pred_check
      _
    $region7: #{tpu_custom_call.1} parent=1 // pred_check_branch
      %20 = sbr.rel (0) target = $region9
    $region8: #{tpu_custom_call.1} parent=1 // pred_region
      _
    $region9: #{tpu_custom_call.1} parent=1 // pred_fallthru
      _
    // Predicated region
    $region10: #{tpu_custom_call.1} parent=1 // pred_check
      _
    $region11: #{tpu_custom_call.1} parent=1 // pred_check_branch
      %22 = sbr.rel (0) target = $region13
    $region12: #{tpu_custom_call.1} parent=1 // pred_region
      _
    $region13: #{tpu_custom_call.1} parent=1 // pred_fallthru
      _
    // Predicated region
    $region14: #{tpu_custom_call.1} parent=1 // pred_check
      _
    $region15: #{tpu_custom_call.1} parent=1 // pred_check_branch
      %24 = sbr.rel (0) target = $region17
    $region16: #{tpu_custom_call.1} parent=1 // pred_region
      _
    $region17: #{tpu_custom_call.1} parent=1 // pred_fallthru
      _
    // Predicated region
    $region18: #{tpu_custom_call.1} parent=1 // pred_check
      _
    $region19: #{tpu_custom_call.1} parent=1 // pred_check_branch
      %26 = sbr.rel (0) target = $region21
    $region20: #{tpu_custom_call.1} parent=1 // pred_region
      _
    $region21: #{tpu_custom_call.1} parent=1 // pred_fallthru
      _
    // Predicated region
    $region22: #{tpu_custom_call.1} parent=1 // pred_check
      _
    $region23: #{tpu_custom_call.1} parent=1 // pred_check_branch
      %28 = sbr.rel (0) target = $region25
    $region24: #{tpu_custom_call.1} parent=1 // pred_region
      _
    $region25: #{tpu_custom_call.1} parent=1 // pred_fallthru
      _
    // Predicated region
    $region26: #{tpu_custom_call.1} parent=1 // pred_check
      _
    $region27: #{tpu_custom_call.1} parent=1 // pred_check_branch
      %30 = sbr.rel (0) target = $region29
    $region28: #{tpu_custom_call.1} parent=1 // pred_region
      _
    $region29: #{tpu_custom_call.1} parent=1 // pred_fallthru
      _
    // Predicated region
    $region30: #{tpu_custom_call.1} parent=1 // pred_check
      _
    $region31: #{tpu_custom_call.1} parent=1 // pred_check_branch
      %32 = sbr.rel (0) target = $region33
    $region32: #{tpu_custom_call.1} parent=1 // pred_region
      _
    $region33: #{tpu_custom_call.1} parent=1 // pred_fallthru
      _
    // Predicated region
    $region34: #{tpu_custom_call.1} parent=1 // pred_check
      _
    $region35: #{tpu_custom_call.1} parent=1 // pred_check_branch
      %34 = sbr.rel (0) target = $region37
    $region36: #{tpu_custom_call.1} parent=1 // pred_region
      _
    $region37: #{tpu_custom_call.1} parent=1 // pred_fallthru
      _
    %v35 = vld [vmem:[%s0] sm:$0x1]
    %v36 = vld [vmem:[%s1] sm:$0xff]
    %v37 = vld [vmem:[%s1 + $0x8] sm:$0xff]
    %v38 = vld [vmem:[%s1 + $0x10] sm:$0xff]
    %v39 = vld [vmem:[%s1 + $0x18] sm:$0xff]
    %v40 = vld [vmem:[%s1 + $0x20] sm:$0xff]
    %v41 = vld [vmem:[%s1 + $0x28] sm:$0xff]
    %v42 = vld [vmem:[%s1 + $0x30] sm:$0xff]
    %v43 = vld [vmem:[%s1 + $0x38] sm:$0xff]
    %v44 = vld [vmem:[%s1 + $0x40] sm:$0xff]
    %v45 = vld [vmem:[%s1 + $0x48] sm:$0xff]
    %v46 = vld [vmem:[%s1 + $0x50] sm:$0xff]
    %v47 = vld [vmem:[%s1 + $0x58] sm:$0xff]
    %v48 = vld [vmem:[%s1 + $0x60] sm:$0xff]
    %v49 = vld [vmem:[%s1 + $0x68] sm:$0xff]
    %v50 = vld [vmem:[%s1 + $0x70] sm:$0xff]
    %v51 = vld [vmem:[%s1 + $0x78] sm:$0xff]
    %53 = vset.pattern.permute.xlu0 0
    %54 = vperm.xlu0 %53, %v36
    %v55 = vpop.permute.xlu0 %54
    %58 = vset.pattern.permute.xlu0 0
    %59 = vperm.xlu0 %58, %v37
    %v60 = vpop.permute.xlu0 %59
    %63 = vset.pattern.permute.xlu0 0
    %64 = vperm.xlu0 %63, %v38
    %v65 = vpop.permute.xlu0 %64
    %68 = vset.pattern.permute.xlu0 0
    %69 = vperm.xlu0 %68, %v39
    %v70 = vpop.permute.xlu0 %69
    %73 = vset.pattern.permute.xlu0 0
    %74 = vperm.xlu0 %73, %v40
    %v75 = vpop.permute.xlu0 %74
    %78 = vset.pattern.permute.xlu0 0
    %79 = vperm.xlu0 %78, %v41
    %v80 = vpop.permute.xlu0 %79
    %83 = vset.pattern.permute.xlu0 0
    %84 = vperm.xlu0 %83, %v42
    %v85 = vpop.permute.xlu0 %84
    %88 = vset.pattern.permute.xlu0 0
    %89 = vperm.xlu0 %88, %v43
    %v90 = vpop.permute.xlu0 %89
    %93 = vset.pattern.permute.xlu0 0
    %94 = vperm.xlu0 %93, %v44
    %v95 = vpop.permute.xlu0 %94
    %98 = vset.pattern.permute.xlu0 0
    %99 = vperm.xlu0 %98, %v45
    %v100 = vpop.permute.xlu0 %99
    %103 = vset.pattern.permute.xlu0 0
    %104 = vperm.xlu0 %103, %v46
    %v105 = vpop.permute.xlu0 %104
    %108 = vset.pattern.permute.xlu0 0
    %109 = vperm.xlu0 %108, %v47
    %v110 = vpop.permute.xlu0 %109
    %113 = vset.pattern.permute.xlu0 0
    %114 = vperm.xlu0 %113, %v48
    %v115 = vpop.permute.xlu0 %114
    %118 = vset.pattern.permute.xlu0 0
    %119 = vperm.xlu0 %118, %v49
    %v120 = vpop.permute.xlu0 %119
    %123 = vset.pattern.permute.xlu0 0
    %124 = vperm.xlu0 %123, %v50
    %v125 = vpop.permute.xlu0 %124
    %128 = vset.pattern.permute.xlu0 0
    %129 = vperm.xlu0 %128, %v51
    %v130 = vpop.permute.xlu0 %129
    %v133 = vlaneseq
    %v134 = vshrl.u32 %v133, 7
    %v135 = vsub.s32 0, %v134
    %v136 = vrot.slane %v35, %v135
    %v138 = vmul.f32 %v55, %v136
    %v139 = vmul.f32 %v60, %v136
    %v140 = vmul.f32 %v65, %v136
    %v141 = vmul.f32 %v70, %v136
    %v142 = vmul.f32 %v75, %v136
    %v143 = vmul.f32 %v80, %v136
    %v144 = vmul.f32 %v85, %v136
    %v145 = vmul.f32 %v90, %v136
    %v146 = vmul.f32 %v95, %v136
    %v147 = vmul.f32 %v100, %v136
    %v148 = vmul.f32 %v105, %v136
    %v149 = vmul.f32 %v110, %v136
    %v150 = vmul.f32 %v115, %v136
    %v151 = vmul.f32 %v120, %v136
    %v152 = vmul.f32 %v125, %v136
    %v153 = vmul.f32 %v130, %v136
    %v154 = vld [vmem:[%s2] sm:$0xff]
    %v155 = vld [vmem:[%s2 + $0x8] sm:$0xff]
    %v156 = vld [vmem:[%s2 + $0x10] sm:$0xff]
    %v157 = vld [vmem:[%s2 + $0x18] sm:$0xff]
    %v158 = vld [vmem:[%s2 + $0x20] sm:$0xff]
    %v159 = vld [vmem:[%s2 + $0x28] sm:$0xff]
    %v160 = vld [vmem:[%s2 + $0x30] sm:$0xff]
    %v161 = vld [vmem:[%s2 + $0x38] sm:$0xff]
    %v162 = vld [vmem:[%s2 + $0x40] sm:$0xff]
    %v163 = vld [vmem:[%s2 + $0x48] sm:$0xff]
    %v164 = vld [vmem:[%s2 + $0x50] sm:$0xff]
    %v165 = vld [vmem:[%s2 + $0x58] sm:$0xff]
    %v166 = vld [vmem:[%s2 + $0x60] sm:$0xff]
    %v167 = vld [vmem:[%s2 + $0x68] sm:$0xff]
    %v168 = vld [vmem:[%s2 + $0x70] sm:$0xff]
    %v169 = vld [vmem:[%s2 + $0x78] sm:$0xff]
    %171 = vset.pattern.permute.xlu0 0
    %172 = vperm.xlu0 %171, %v154
    %v173 = vpop.permute.xlu0 %172
    %176 = vset.pattern.permute.xlu0 0
    %177 = vperm.xlu0 %176, %v155
    %v178 = vpop.permute.xlu0 %177
    %181 = vset.pattern.permute.xlu0 0
    %182 = vperm.xlu0 %181, %v156
    %v183 = vpop.permute.xlu0 %182
    %186 = vset.pattern.permute.xlu0 0
    %187 = vperm.xlu0 %186, %v157
    %v188 = vpop.permute.xlu0 %187
    %191 = vset.pattern.permute.xlu0 0
    %192 = vperm.xlu0 %191, %v158
    %v193 = vpop.permute.xlu0 %192
    %196 = vset.pattern.permute.xlu0 0
    %197 = vperm.xlu0 %196, %v159
    %v198 = vpop.permute.xlu0 %197
    %201 = vset.pattern.permute.xlu0 0
    %202 = vperm.xlu0 %201, %v160
    %v203 = vpop.permute.xlu0 %202
    %206 = vset.pattern.permute.xlu0 0
    %207 = vperm.xlu0 %206, %v161
    %v208 = vpop.permute.xlu0 %207
    %211 = vset.pattern.permute.xlu0 0
    %212 = vperm.xlu0 %211, %v162
    %v213 = vpop.permute.xlu0 %212
    %216 = vset.pattern.permute.xlu0 0
    %217 = vperm.xlu0 %216, %v163
    %v218 = vpop.permute.xlu0 %217
    %221 = vset.pattern.permute.xlu0 0
    %222 = vperm.xlu0 %221, %v164
    %v223 = vpop.permute.xlu0 %222
    %226 = vset.pattern.permute.xlu0 0
    %227 = vperm.xlu0 %226, %v165
    %v228 = vpop.permute.xlu0 %227
    %231 = vset.pattern.permute.xlu0 0
    %232 = vperm.xlu0 %231, %v166
    %v233 = vpop.permute.xlu0 %232
    %236 = vset.pattern.permute.xlu0 0
    %237 = vperm.xlu0 %236, %v167
    %v238 = vpop.permute.xlu0 %237
    %241 = vset.pattern.permute.xlu0 0
    %242 = vperm.xlu0 %241, %v168
    %v243 = vpop.permute.xlu0 %242
    %246 = vset.pattern.permute.xlu0 0
    %247 = vperm.xlu0 %246, %v169
    %v248 = vpop.permute.xlu0 %247
    %v250 = vadd.f32 %v138, %v173
    %v251 = vadd.f32 %v139, %v178
    %v252 = vadd.f32 %v140, %v183
    %v253 = vadd.f32 %v141, %v188
    %v254 = vadd.f32 %v142, %v193
    %v255 = vadd.f32 %v143, %v198
    %v256 = vadd.f32 %v144, %v203
    %v257 = vadd.f32 %v145, %v208
    %v258 = vadd.f32 %v146, %v213
    %v259 = vadd.f32 %v147, %v218
    %v260 = vadd.f32 %v148, %v223
    %v261 = vadd.f32 %v149, %v228
    %v262 = vadd.f32 %v150, %v233
    %v263 = vadd.f32 %v151, %v238
    %v264 = vadd.f32 %v152, %v243
    %v265 = vadd.f32 %v153, %v248
    %v266 = vmul.f32 %v250, 0.02
    %v267 = vmul.f32 %v251, 0.02
    %v268 = vmul.f32 %v252, 0.02
    %v269 = vmul.f32 %v253, 0.02
    %v270 = vmul.f32 %v254, 0.02
    %v271 = vmul.f32 %v255, 0.02
    %v272 = vmul.f32 %v256, 0.02
    %v273 = vmul.f32 %v257, 0.02
    %v274 = vmul.f32 %v258, 0.02
    %v275 = vmul.f32 %v259, 0.02
    %v276 = vmul.f32 %v260, 0.02
    %v277 = vmul.f32 %v261, 0.02
    %v278 = vmul.f32 %v262, 0.02
    %v279 = vmul.f32 %v263, 0.02
    %v280 = vmul.f32 %v264, 0.02
    %v281 = vmul.f32 %v265, 0.02
    %v282 = vmax.f32 %v250, %v266
    %v283 = vmax.f32 %v251, %v267
    %v284 = vmax.f32 %v252, %v268
    %v285 = vmax.f32 %v253, %v269
    %v286 = vmax.f32 %v254, %v270
    %v287 = vmax.f32 %v255, %v271
    %v288 = vmax.f32 %v256, %v272
    %v289 = vmax.f32 %v257, %v273
    %v290 = vmax.f32 %v258, %v274
    %v291 = vmax.f32 %v259, %v275
    %v292 = vmax.f32 %v260, %v276
    %v293 = vmax.f32 %v261, %v277
    %v294 = vmax.f32 %v262, %v278
    %v295 = vmax.f32 %v263, %v279
    %v296 = vmax.f32 %v264, %v280
    %v297 = vmax.f32 %v265, %v281
    %v298 = vld [vmem:[%s3] sm:$0xff]
    %v299 = vld [vmem:[%s3 + $0x8] sm:$0xff]
    %v300 = vld [vmem:[%s3 + $0x10] sm:$0xff]
    %v301 = vld [vmem:[%s3 + $0x18] sm:$0xff]
    %v302 = vld [vmem:[%s3 + $0x20] sm:$0xff]
    %v303 = vld [vmem:[%s3 + $0x28] sm:$0xff]
    %v304 = vld [vmem:[%s3 + $0x30] sm:$0xff]
    %v305 = vld [vmem:[%s3 + $0x38] sm:$0xff]
    %v306 = vld [vmem:[%s3 + $0x40] sm:$0xff]
    %v307 = vld [vmem:[%s3 + $0x48] sm:$0xff]
    %v308 = vld [vmem:[%s3 + $0x50] sm:$0xff]
    %v309 = vld [vmem:[%s3 + $0x58] sm:$0xff]
    %v310 = vld [vmem:[%s3 + $0x60] sm:$0xff]
    %v311 = vld [vmem:[%s3 + $0x68] sm:$0xff]
    %v312 = vld [vmem:[%s3 + $0x70] sm:$0xff]
    %v313 = vld [vmem:[%s3 + $0x78] sm:$0xff]
    %v314 = vld [vmem:[%s4] sm:$0xff]
    %v315 = vld [vmem:[%s4 + $0x8] sm:$0xff]
    %v316 = vld [vmem:[%s4 + $0x10] sm:$0xff]
    %v317 = vld [vmem:[%s4 + $0x18] sm:$0xff]
    %v318 = vld [vmem:[%s4 + $0x20] sm:$0xff]
    %v319 = vld [vmem:[%s4 + $0x28] sm:$0xff]
    %v320 = vld [vmem:[%s4 + $0x30] sm:$0xff]
    %v321 = vld [vmem:[%s4 + $0x38] sm:$0xff]
    %v322 = vld [vmem:[%s4 + $0x40] sm:$0xff]
    %v323 = vld [vmem:[%s4 + $0x48] sm:$0xff]
    %v324 = vld [vmem:[%s4 + $0x50] sm:$0xff]
    %v325 = vld [vmem:[%s4 + $0x58] sm:$0xff]
    %v326 = vld [vmem:[%s4 + $0x60] sm:$0xff]
    %v327 = vld [vmem:[%s4 + $0x68] sm:$0xff]
    %v328 = vld [vmem:[%s4 + $0x70] sm:$0xff]
    %v329 = vld [vmem:[%s4 + $0x78] sm:$0xff]
    %331 = vset.pattern.permute.xlu0 0
    %332 = vperm.xlu0 %331, %v314
    %v333 = vpop.permute.xlu0 %332
    %336 = vset.pattern.permute.xlu0 0
    %337 = vperm.xlu0 %336, %v315
    %v338 = vpop.permute.xlu0 %337
    %341 = vset.pattern.permute.xlu0 0
    %342 = vperm.xlu0 %341, %v316
    %v343 = vpop.permute.xlu0 %342
    %346 = vset.pattern.permute.xlu0 0
    %347 = vperm.xlu0 %346, %v317
    %v348 = vpop.permute.xlu0 %347
    %351 = vset.pattern.permute.xlu0 0
    %352 = vperm.xlu0 %351, %v318
    %v353 = vpop.permute.xlu0 %352
    %356 = vset.pattern.permute.xlu0 0
    %357 = vperm.xlu0 %356, %v319
    %v358 = vpop.permute.xlu0 %357
    %361 = vset.pattern.permute.xlu0 0
    %362 = vperm.xlu0 %361, %v320
    %v363 = vpop.permute.xlu0 %362
    %366 = vset.pattern.permute.xlu0 0
    %367 = vperm.xlu0 %366, %v321
    %v368 = vpop.permute.xlu0 %367
    %371 = vset.pattern.permute.xlu0 0
    %372 = vperm.xlu0 %371, %v322
    %v373 = vpop.permute.xlu0 %372
    %376 = vset.pattern.permute.xlu0 0
    %377 = vperm.xlu0 %376, %v323
    %v378 = vpop.permute.xlu0 %377
    %381 = vset.pattern.permute.xlu0 0
    %382 = vperm.xlu0 %381, %v324
    %v383 = vpop.permute.xlu0 %382
    %386 = vset.pattern.permute.xlu0 0
    %387 = vperm.xlu0 %386, %v325
    %v388 = vpop.permute.xlu0 %387
    %391 = vset.pattern.permute.xlu0 0
    %392 = vperm.xlu0 %391, %v326
    %v393 = vpop.permute.xlu0 %392
    %396 = vset.pattern.permute.xlu0 0
    %397 = vperm.xlu0 %396, %v327
    %v398 = vpop.permute.xlu0 %397
    %401 = vset.pattern.permute.xlu0 0
    %402 = vperm.xlu0 %401, %v328
    %v403 = vpop.permute.xlu0 %402
    %406 = vset.pattern.permute.xlu0 0
    %407 = vperm.xlu0 %406, %v329
    %v408 = vpop.permute.xlu0 %407
    %410 = vmatprep.subr.mxu0 0.0
    %411 = vmatpush1.msra.mxu0 %v282
    %412 = vmatprep.subr.mxu0 0.0
    %413 = vmatpush1.msra.mxu0 %v283
    %414 = vmatprep.subr.mxu0 0.0
    %415 = vmatpush1.msra.mxu0 %v284
    %416 = vmatprep.subr.mxu0 0.0
    %417 = vmatpush1.msra.mxu0 %v285
    %418 = vmatprep.subr.mxu0 0.0
    %419 = vmatpush1.msra.mxu0 %v286
    %420 = vmatprep.subr.mxu0 0.0
    %421 = vmatpush1.msra.mxu0 %v287
    %422 = vmatprep.subr.mxu0 0.0
    %423 = vmatpush1.msra.mxu0 %v288
    %424 = vmatprep.subr.mxu0 0.0
    %425 = vmatpush1.msra.mxu0 %v289
    %426 = vmatprep.subr.mxu0 0.0
    %427 = vmatpush1.msra.mxu0 %v290
    %428 = vmatprep.subr.mxu0 0.0
    %429 = vmatpush1.msra.mxu0 %v291
    %430 = vmatprep.subr.mxu0 0.0
    %431 = vmatpush1.msra.mxu0 %v292
    %432 = vmatprep.subr.mxu0 0.0
    %433 = vmatpush1.msra.mxu0 %v293
    %434 = vmatprep.subr.mxu0 0.0
    %435 = vmatpush1.msra.mxu0 %v294
    %436 = vmatprep.subr.mxu0 0.0
    %437 = vmatpush1.msra.mxu0 %v295
    %438 = vmatprep.subr.mxu0 0.0
    %439 = vmatpush1.msra.mxu0 %v296
    %440 = vmatprep.subr.mxu0 0.0
    %441 = vmatpush1.msra.mxu0 %v297
    %442 = vmatprep.subr.mxu0 0.0
    %443 = vmatpush1.msra.mxu0 0.0
    %444 = vmatprep.subr.mxu0 0.0
    %445 = vmatpush1.msra.mxu0 0.0
    %446 = vmatprep.subr.mxu0 0.0
    %447 = vmatpush1.msra.mxu0 0.0
    %448 = vmatprep.subr.mxu0 0.0
    %449 = vmatpush1.msra.mxu0 0.0
    %450 = vmatprep.subr.mxu0 0.0
    %451 = vmatpush1.msra.mxu0 0.0
    %452 = vmatprep.subr.mxu0 0.0
    %453 = vmatpush1.msra.mxu0 0.0
    %454 = vmatprep.subr.mxu0 0.0
    %455 = vmatpush1.msra.mxu0 0.0
    %456 = vmatprep.subr.mxu0 0.0
    %457 = vmatpush1.msra.mxu0 0.0
    %458 = vmatprep.subr.mxu0 0.0
    %459 = vmatpush1.msra.mxu0 0.0
    %460 = vmatprep.subr.mxu0 0.0
    %461 = vmatpush1.msra.mxu0 0.0
    %462 = vmatprep.subr.mxu0 0.0
    %463 = vmatpush1.msra.mxu0 0.0
    %464 = vmatprep.subr.mxu0 0.0
    %465 = vmatpush1.msra.mxu0 0.0
    %466 = vmatprep.subr.mxu0 0.0
    %467 = vmatpush1.msra.mxu0 0.0
    %468 = vmatprep.subr.mxu0 0.0
    %469 = vmatpush1.msra.mxu0 0.0
    %470 = vmatprep.subr.mxu0 0.0
    %471 = vmatpush1.msra.mxu0 0.0
    %472 = vmatprep.subr.mxu0 0.0
    %473 = vmatpush1.msra.mxu0 0.0
    %474 = vmatprep.mubr.f32.mxu0 0.0
    %475 = vmatmul.mubr.f32.gmra.mrb[0].mxu0 %v298
    %v476 = vpop.f32.mrb[0].mxu0
    %v477 = vadd.f32 %v333, %v476
    %v478 = vpop.f32.mrb[0].mxu0
    %479 = vmatprep.mubr.f32.mxu0 0.0
    %480 = vmatmul.mubr.f32.gmra.mrb[0].mxu0 %v299
    %v481 = vpop.f32.mrb[0].mxu0
    %v482 = vadd.f32 %v338, %v481
    %v483 = vpop.f32.mrb[0].mxu0
    %484 = vmatprep.mubr.f32.mxu0 0.0
    %485 = vmatmul.mubr.f32.gmra.mrb[0].mxu0 %v300
    %v486 = vpop.f32.mrb[0].mxu0
    %v487 = vadd.f32 %v343, %v486
    %v488 = vpop.f32.mrb[0].mxu0
    %489 = vmatprep.mubr.f32.mxu0 0.0
    %490 = vmatmul.mubr.f32.gmra.mrb[0].mxu0 %v301
    %v491 = vpop.f32.mrb[0].mxu0
    %v492 = vadd.f32 %v348, %v491
    %v493 = vpop.f32.mrb[0].mxu0
    %494 = vmatprep.mubr.f32.mxu0 0.0
    %495 = vmatmul.mubr.f32.gmra.mrb[0].mxu0 %v302
    %v496 = vpop.f32.mrb[0].mxu0
    %v497 = vadd.f32 %v353, %v496
    %v498 = vpop.f32.mrb[0].mxu0
    %499 = vmatprep.mubr.f32.mxu0 0.0
    %500 = vmatmul.mubr.f32.gmra.mrb[0].mxu0 %v303
    %v501 = vpop.f32.mrb[0].mxu0
    %v502 = vadd.f32 %v358, %v501
    %v503 = vpop.f32.mrb[0].mxu0
    %504 = vmatprep.mubr.f32.mxu0 0.0
    %505 = vmatmul.mubr.f32.gmra.mrb[0].mxu0 %v304
    %v506 = vpop.f32.mrb[0].mxu0
    %v507 = vadd.f32 %v363, %v506
    %v508 = vpop.f32.mrb[0].mxu0
    %509 = vmatprep.mubr.f32.mxu0 0.0
    %510 = vmatmul.mubr.f32.gmra.mrb[0].mxu0 %v305
    %v511 = vpop.f32.mrb[0].mxu0
    %v512 = vadd.f32 %v368, %v511
    %v513 = vpop.f32.mrb[0].mxu0
    %514 = vmatprep.mubr.f32.mxu0 0.0
    %515 = vmatmul.mubr.f32.gmra.mrb[0].mxu0 %v306
    %v516 = vpop.f32.mrb[0].mxu0
    %v517 = vadd.f32 %v373, %v516
    %v518 = vpop.f32.mrb[0].mxu0
    %519 = vmatprep.mubr.f32.mxu0 0.0
    %520 = vmatmul.mubr.f32.gmra.mrb[0].mxu0 %v307
    %v521 = vpop.f32.mrb[0].mxu0
    %v522 = vadd.f32 %v378, %v521
    %v523 = vpop.f32.mrb[0].mxu0
    %524 = vmatprep.mubr.f32.mxu0 0.0
    %525 = vmatmul.mubr.f32.gmra.mrb[0].mxu0 %v308
    %v526 = vpop.f32.mrb[0].mxu0
    %v527 = vadd.f32 %v383, %v526
    %v528 = vpop.f32.mrb[0].mxu0
    %529 = vmatprep.mubr.f32.mxu0 0.0
    %530 = vmatmul.mubr.f32.gmra.mrb[0].mxu0 %v309
    %v531 = vpop.f32.mrb[0].mxu0
    %v532 = vadd.f32 %v388, %v531
    %v533 = vpop.f32.mrb[0].mxu0
    %534 = vmatprep.mubr.f32.mxu0 0.0
    %535 = vmatmul.mubr.f32.gmra.mrb[0].mxu0 %v310
    %v536 = vpop.f32.mrb[0].mxu0
    %v537 = vadd.f32 %v393, %v536
    %v538 = vpop.f32.mrb[0].mxu0
    %539 = vmatprep.mubr.f32.mxu0 0.0
    %540 = vmatmul.mubr.f32.gmra.mrb[0].mxu0 %v311
    %v541 = vpop.f32.mrb[0].mxu0
    %v542 = vadd.f32 %v398, %v541
    %v543 = vpop.f32.mrb[0].mxu0
    %544 = vmatprep.mubr.f32.mxu0 0.0
    %545 = vmatmul.mubr.f32.gmra.mrb[0].mxu0 %v312
    %v546 = vpop.f32.mrb[0].mxu0
    %v547 = vadd.f32 %v403, %v546
    %v548 = vpop.f32.mrb[0].mxu0
    %549 = vmatprep.mubr.f32.mxu0 0.0
    %550 = vmatmul.mubr.f32.gmra.mrb[0].mxu0 %v313
    %v551 = vpop.f32.mrb[0].mxu0
    %v552 = vadd.f32 %v408, %v551
    %v553 = vpop.f32.mrb[0].mxu0
    %554 = vdwg.mxu0
    %v555 = vmul.f32 %v477, 0.02
    %v556 = vmul.f32 %v482, 0.02
    %v557 = vmul.f32 %v487, 0.02
    %v558 = vmul.f32 %v492, 0.02
    %v559 = vmul.f32 %v497, 0.02
    %v560 = vmul.f32 %v502, 0.02
    %v561 = vmul.f32 %v507, 0.02
    %v562 = vmul.f32 %v512, 0.02
    %v563 = vmul.f32 %v517, 0.02
    %v564 = vmul.f32 %v522, 0.02
    %v565 = vmul.f32 %v527, 0.02
    %v566 = vmul.f32 %v532, 0.02
    %v567 = vmul.f32 %v537, 0.02
    %v568 = vmul.f32 %v542, 0.02
    %v569 = vmul.f32 %v547, 0.02
    %v570 = vmul.f32 %v552, 0.02
    %v571 = vmax.f32 %v477, %v555
    %v572 = vmax.f32 %v482, %v556
    %v573 = vmax.f32 %v487, %v557
    %v574 = vmax.f32 %v492, %v558
    %v575 = vmax.f32 %v497, %v559
    %v576 = vmax.f32 %v502, %v560
    %v577 = vmax.f32 %v507, %v561
    %v578 = vmax.f32 %v512, %v562
    %v579 = vmax.f32 %v517, %v563
    %v580 = vmax.f32 %v522, %v564
    %v581 = vmax.f32 %v527, %v565
    %v582 = vmax.f32 %v532, %v566
    %v583 = vmax.f32 %v537, %v567
    %v584 = vmax.f32 %v542, %v568
    %v585 = vmax.f32 %v547, %v569
    %v586 = vmax.f32 %v552, %v570
    %v587 = vld [vmem:[%s5] sm:$0xff]
    %v588 = vld [vmem:[%s5 + $0x8] sm:$0xff]
    %v589 = vld [vmem:[%s5 + $0x10] sm:$0xff]
    %v590 = vld [vmem:[%s5 + $0x18] sm:$0xff]
    %v591 = vld [vmem:[%s5 + $0x20] sm:$0xff]
    %v592 = vld [vmem:[%s5 + $0x28] sm:$0xff]
    %v593 = vld [vmem:[%s5 + $0x30] sm:$0xff]
    %v594 = vld [vmem:[%s5 + $0x38] sm:$0xff]
    %v595 = vld [vmem:[%s5 + $0x40] sm:$0xff]
    %v596 = vld [vmem:[%s5 + $0x48] sm:$0xff]
    %v597 = vld [vmem:[%s5 + $0x50] sm:$0xff]
    %v598 = vld [vmem:[%s5 + $0x58] sm:$0xff]
    %v599 = vld [vmem:[%s5 + $0x60] sm:$0xff]
    %v600 = vld [vmem:[%s5 + $0x68] sm:$0xff]
    %v601 = vld [vmem:[%s5 + $0x70] sm:$0xff]
    %v602 = vld [vmem:[%s5 + $0x78] sm:$0xff]
    %v603 = vld [vmem:[%s6] sm:$0xff]
    %v604 = vld [vmem:[%s6 + $0x8] sm:$0xff]
    %v605 = vld [vmem:[%s6 + $0x10] sm:$0xff]
    %v606 = vld [vmem:[%s6 + $0x18] sm:$0xff]
    %v607 = vld [vmem:[%s6 + $0x20] sm:$0xff]
    %v608 = vld [vmem:[%s6 + $0x28] sm:$0xff]
    %v609 = vld [vmem:[%s6 + $0x30] sm:$0xff]
    %v610 = vld [vmem:[%s6 + $0x38] sm:$0xff]
    %v611 = vld [vmem:[%s6 + $0x40] sm:$0xff]
    %v612 = vld [vmem:[%s6 + $0x48] sm:$0xff]
    %v613 = vld [vmem:[%s6 + $0x50] sm:$0xff]
    %v614 = vld [vmem:[%s6 + $0x58] sm:$0xff]
    %v615 = vld [vmem:[%s6 + $0x60] sm:$0xff]
    %v616 = vld [vmem:[%s6 + $0x68] sm:$0xff]
    %v617 = vld [vmem:[%s6 + $0x70] sm:$0xff]
    %v618 = vld [vmem:[%s6 + $0x78] sm:$0xff]
    %620 = vset.pattern.permute.xlu0 0
    %621 = vperm.xlu0 %620, %v603
    %v622 = vpop.permute.xlu0 %621
    %625 = vset.pattern.permute.xlu0 0
    %626 = vperm.xlu0 %625, %v604
    %v627 = vpop.permute.xlu0 %626
    %630 = vset.pattern.permute.xlu0 0
    %631 = vperm.xlu0 %630, %v605
    %v632 = vpop.permute.xlu0 %631
    %635 = vset.pattern.permute.xlu0 0
    %636 = vperm.xlu0 %635, %v606
    %v637 = vpop.permute.xlu0 %636
    %640 = vset.pattern.permute.xlu0 0
    %641 = vperm.xlu0 %640, %v607
    %v642 = vpop.permute.xlu0 %641
    %645 = vset.pattern.permute.xlu0 0
    %646 = vperm.xlu0 %645, %v608
    %v647 = vpop.permute.xlu0 %646
    %650 = vset.pattern.permute.xlu0 0
    %651 = vperm.xlu0 %650, %v609
    %v652 = vpop.permute.xlu0 %651
    %655 = vset.pattern.permute.xlu0 0
    %656 = vperm.xlu0 %655, %v610
    %v657 = vpop.permute.xlu0 %656
    %660 = vset.pattern.permute.xlu0 0
    %661 = vperm.xlu0 %660, %v611
    %v662 = vpop.permute.xlu0 %661
    %665 = vset.pattern.permute.xlu0 0
    %666 = vperm.xlu0 %665, %v612
    %v667 = vpop.permute.xlu0 %666
    %670 = vset.pattern.permute.xlu0 0
    %671 = vperm.xlu0 %670, %v613
    %v672 = vpop.permute.xlu0 %671
    %675 = vset.pattern.permute.xlu0 0
    %676 = vperm.xlu0 %675, %v614
    %v677 = vpop.permute.xlu0 %676
    %680 = vset.pattern.permute.xlu0 0
    %681 = vperm.xlu0 %680, %v615
    %v682 = vpop.permute.xlu0 %681
    %685 = vset.pattern.permute.xlu0 0
    %686 = vperm.xlu0 %685, %v616
    %v687 = vpop.permute.xlu0 %686
    %690 = vset.pattern.permute.xlu0 0
    %691 = vperm.xlu0 %690, %v617
    %v692 = vpop.permute.xlu0 %691
    %695 = vset.pattern.permute.xlu0 0
    %696 = vperm.xlu0 %695, %v618
    %v697 = vpop.permute.xlu0 %696
    %699 = vmatprep.subr.mxu0 0.0
    %700 = vmatpush1.msra.mxu0 %v571
    %701 = vmatprep.subr.mxu0 0.0
    %702 = vmatpush1.msra.mxu0 %v572
    %703 = vmatprep.subr.mxu0 0.0
    %704 = vmatpush1.msra.mxu0 %v573
    %705 = vmatprep.subr.mxu0 0.0
    %706 = vmatpush1.msra.mxu0 %v574
    %707 = vmatprep.subr.mxu0 0.0
    %708 = vmatpush1.msra.mxu0 %v575
    %709 = vmatprep.subr.mxu0 0.0
    %710 = vmatpush1.msra.mxu0 %v576
    %711 = vmatprep.subr.mxu0 0.0
    %712 = vmatpush1.msra.mxu0 %v577
    %713 = vmatprep.subr.mxu0 0.0
    %714 = vmatpush1.msra.mxu0 %v578
    %715 = vmatprep.subr.mxu0 0.0
    %716 = vmatpush1.msra.mxu0 %v579
    %717 = vmatprep.subr.mxu0 0.0
    %718 = vmatpush1.msra.mxu0 %v580
    %719 = vmatprep.subr.mxu0 0.0
    %720 = vmatpush1.msra.mxu0 %v581
    %721 = vmatprep.subr.mxu0 0.0
    %722 = vmatpush1.msra.mxu0 %v582
    %723 = vmatprep.subr.mxu0 0.0
    %724 = vmatpush1.msra.mxu0 %v583
    %725 = vmatprep.subr.mxu0 0.0
    %726 = vmatpush1.msra.mxu0 %v584
    %727 = vmatprep.subr.mxu0 0.0
    %728 = vmatpush1.msra.mxu0 %v585
    %729 = vmatprep.subr.mxu0 0.0
    %730 = vmatpush1.msra.mxu0 %v586
    %731 = vmatprep.subr.mxu0 0.0
    %732 = vmatpush1.msra.mxu0 0.0
    %733 = vmatprep.subr.mxu0 0.0
    %734 = vmatpush1.msra.mxu0 0.0
    %735 = vmatprep.subr.mxu0 0.0
    %736 = vmatpush1.msra.mxu0 0.0
    %737 = vmatprep.subr.mxu0 0.0
    %738 = vmatpush1.msra.mxu0 0.0
    %739 = vmatprep.subr.mxu0 0.0
    %740 = vmatpush1.msra.mxu0 0.0
    %741 = vmatprep.subr.mxu0 0.0
    %742 = vmatpush1.msra.mxu0 0.0
    %743 = vmatprep.subr.mxu0 0.0
    %744 = vmatpush1.msra.mxu0 0.0
    %745 = vmatprep.subr.mxu0 0.0
    %746 = vmatpush1.msra.mxu0 0.0
    %747 = vmatprep.subr.mxu0 0.0
    %748 = vmatpush1.msra.mxu0 0.0
    %749 = vmatprep.subr.mxu0 0.0
    %750 = vmatpush1.msra.mxu0 0.0
    %751 = vmatprep.subr.mxu0 0.0
    %752 = vmatpush1.msra.mxu0 0.0
    %753 = vmatprep.subr.mxu0 0.0
    %754 = vmatpush1.msra.mxu0 0.0
    %755 = vmatprep.subr.mxu0 0.0
    %756 = vmatpush1.msra.mxu0 0.0
    %757 = vmatprep.subr.mxu0 0.0
    %758 = vmatpush1.msra.mxu0 0.0
    %759 = vmatprep.subr.mxu0 0.0
    %760 = vmatpush1.msra.mxu0 0.0
    %761 = vmatprep.subr.mxu0 0.0
    %762 = vmatpush1.msra.mxu0 0.0
    %763 = vmatprep.mubr.f32.mxu0 0.0
    %764 = vmatmul.mubr.f32.gmra.mrb[0].mxu0 %v587
    %v765 = vpop.f32.mrb[0].mxu0
    %v766 = vadd.f32 %v622, %v765
    %v767 = vpop.f32.mrb[0].mxu0
    %768 = vmatprep.mubr.f32.mxu0 0.0
    %769 = vmatmul.mubr.f32.gmra.mrb[0].mxu0 %v588
    %v770 = vpop.f32.mrb[0].mxu0
    %v771 = vadd.f32 %v627, %v770
    %v772 = vpop.f32.mrb[0].mxu0
    %773 = vmatprep.mubr.f32.mxu0 0.0
    %774 = vmatmul.mubr.f32.gmra.mrb[0].mxu0 %v589
    %v775 = vpop.f32.mrb[0].mxu0
    %v776 = vadd.f32 %v632, %v775
    %v777 = vpop.f32.mrb[0].mxu0
    %778 = vmatprep.mubr.f32.mxu0 0.0
    %779 = vmatmul.mubr.f32.gmra.mrb[0].mxu0 %v590
    %v780 = vpop.f32.mrb[0].mxu0
    %v781 = vadd.f32 %v637, %v780
    %v782 = vpop.f32.mrb[0].mxu0
    %783 = vmatprep.mubr.f32.mxu0 0.0
    %784 = vmatmul.mubr.f32.gmra.mrb[0].mxu0 %v591
    %v785 = vpop.f32.mrb[0].mxu0
    %v786 = vadd.f32 %v642, %v785
    %v787 = vpop.f32.mrb[0].mxu0
    %788 = vmatprep.mubr.f32.mxu0 0.0
    %789 = vmatmul.mubr.f32.gmra.mrb[0].mxu0 %v592
    %v790 = vpop.f32.mrb[0].mxu0
    %v791 = vadd.f32 %v647, %v790
    %v792 = vpop.f32.mrb[0].mxu0
    %793 = vmatprep.mubr.f32.mxu0 0.0
    %794 = vmatmul.mubr.f32.gmra.mrb[0].mxu0 %v593
    %v795 = vpop.f32.mrb[0].mxu0
    %v796 = vadd.f32 %v652, %v795
    %v797 = vpop.f32.mrb[0].mxu0
    %798 = vmatprep.mubr.f32.mxu0 0.0
    %799 = vmatmul.mubr.f32.gmra.mrb[0].mxu0 %v594
    %v800 = vpop.f32.mrb[0].mxu0
    %v801 = vadd.f32 %v657, %v800
    %v802 = vpop.f32.mrb[0].mxu0
    %803 = vmatprep.mubr.f32.mxu0 0.0
    %804 = vmatmul.mubr.f32.gmra.mrb[0].mxu0 %v595
    %v805 = vpop.f32.mrb[0].mxu0
    %v806 = vadd.f32 %v662, %v805
    %v807 = vpop.f32.mrb[0].mxu0
    %808 = vmatprep.mubr.f32.mxu0 0.0
    %809 = vmatmul.mubr.f32.gmra.mrb[0].mxu0 %v596
    %v810 = vpop.f32.mrb[0].mxu0
    %v811 = vadd.f32 %v667, %v810
    %v812 = vpop.f32.mrb[0].mxu0
    %813 = vmatprep.mubr.f32.mxu0 0.0
    %814 = vmatmul.mubr.f32.gmra.mrb[0].mxu0 %v597
    %v815 = vpop.f32.mrb[0].mxu0
    %v816 = vadd.f32 %v672, %v815
    %v817 = vpop.f32.mrb[0].mxu0
    %818 = vmatprep.mubr.f32.mxu0 0.0
    %819 = vmatmul.mubr.f32.gmra.mrb[0].mxu0 %v598
    %v820 = vpop.f32.mrb[0].mxu0
    %v821 = vadd.f32 %v677, %v820
    %v822 = vpop.f32.mrb[0].mxu0
    %823 = vmatprep.mubr.f32.mxu0 0.0
    %824 = vmatmul.mubr.f32.gmra.mrb[0].mxu0 %v599
    %v825 = vpop.f32.mrb[0].mxu0
    %v826 = vadd.f32 %v682, %v825
    %v827 = vpop.f32.mrb[0].mxu0
    %828 = vmatprep.mubr.f32.mxu0 0.0
    %829 = vmatmul.mubr.f32.gmra.mrb[0].mxu0 %v600
    %v830 = vpop.f32.mrb[0].mxu0
    %v831 = vadd.f32 %v687, %v830
    %v832 = vpop.f32.mrb[0].mxu0
    %833 = vmatprep.mubr.f32.mxu0 0.0
    %834 = vmatmul.mubr.f32.gmra.mrb[0].mxu0 %v601
    %v835 = vpop.f32.mrb[0].mxu0
    %v836 = vadd.f32 %v692, %v835
    %v837 = vpop.f32.mrb[0].mxu0
    %838 = vmatprep.mubr.f32.mxu0 0.0
    %839 = vmatmul.mubr.f32.gmra.mrb[0].mxu0 %v602
    %v840 = vpop.f32.mrb[0].mxu0
    %v841 = vadd.f32 %v697, %v840
    %v842 = vpop.f32.mrb[0].mxu0
    %843 = vdwg.mxu0
    %v844 = vmul.f32 %v766, 0.02
    %v845 = vmul.f32 %v771, 0.02
    %v846 = vmul.f32 %v776, 0.02
    %v847 = vmul.f32 %v781, 0.02
    %v848 = vmul.f32 %v786, 0.02
    %v849 = vmul.f32 %v791, 0.02
    %v850 = vmul.f32 %v796, 0.02
    %v851 = vmul.f32 %v801, 0.02
    %v852 = vmul.f32 %v806, 0.02
    %v853 = vmul.f32 %v811, 0.02
    %v854 = vmul.f32 %v816, 0.02
    %v855 = vmul.f32 %v821, 0.02
    %v856 = vmul.f32 %v826, 0.02
    %v857 = vmul.f32 %v831, 0.02
    %v858 = vmul.f32 %v836, 0.02
    %v859 = vmul.f32 %v841, 0.02
    %v860 = vmax.f32 %v766, %v844
    %v861 = vmax.f32 %v771, %v845
    %v862 = vmax.f32 %v776, %v846
    %v863 = vmax.f32 %v781, %v847
    %v864 = vmax.f32 %v786, %v848
    %v865 = vmax.f32 %v791, %v849
    %v866 = vmax.f32 %v796, %v850
    %v867 = vmax.f32 %v801, %v851
    %v868 = vmax.f32 %v806, %v852
    %v869 = vmax.f32 %v811, %v853
    %v870 = vmax.f32 %v816, %v854
    %v871 = vmax.f32 %v821, %v855
    %v872 = vmax.f32 %v826, %v856
    %v873 = vmax.f32 %v831, %v857
    %v874 = vmax.f32 %v836, %v858
    %v875 = vmax.f32 %v841, %v859
    %v876 = vld [vmem:[%s7] sm:$0x1]
    %v877 = vld [vmem:[#allocation2] sm:$0x1]
    %879 = vset.pattern.permute.xlu0 0
    %880 = vperm.xlu0 %879, %v877
    %v881 = vpop.permute.xlu0 %880
    %v883 = vlaneseq
    %v884 = vshrl.u32 %v883, 7
    %v885 = vsub.s32 0, %v884
    %v886 = vrot.slane %v881, %v885
    %887 = vmatprep.subr.mxu0 0.0
    %888 = vmatpush1.msra.mxu0 %v860
    %889 = vmatprep.subr.mxu0 0.0
    %890 = vmatpush1.msra.mxu0 %v861
    %891 = vmatprep.subr.mxu0 0.0
    %892 = vmatpush1.msra.mxu0 %v862
    %893 = vmatprep.subr.mxu0 0.0
    %894 = vmatpush1.msra.mxu0 %v863
    %895 = vmatprep.subr.mxu0 0.0
    %896 = vmatpush1.msra.mxu0 %v864
    %897 = vmatprep.subr.mxu0 0.0
    %898 = vmatpush1.msra.mxu0 %v865
    %899 = vmatprep.subr.mxu0 0.0
    %900 = vmatpush1.msra.mxu0 %v866
    %901 = vmatprep.subr.mxu0 0.0
    %902 = vmatpush1.msra.mxu0 %v867
    %903 = vmatprep.subr.mxu0 0.0
    %904 = vmatpush1.msra.mxu0 %v868
    %905 = vmatprep.subr.mxu0 0.0
    %906 = vmatpush1.msra.mxu0 %v869
    %907 = vmatprep.subr.mxu0 0.0
    %908 = vmatpush1.msra.mxu0 %v870
    %909 = vmatprep.subr.mxu0 0.0
    %910 = vmatpush1.msra.mxu0 %v871
    %911 = vmatprep.subr.mxu0 0.0
    %912 = vmatpush1.msra.mxu0 %v872
    %913 = vmatprep.subr.mxu0 0.0
    %914 = vmatpush1.msra.mxu0 %v873
    %915 = vmatprep.subr.mxu0 0.0
    %916 = vmatpush1.msra.mxu0 %v874
    %917 = vmatprep.subr.mxu0 0.0
    %918 = vmatpush1.msra.mxu0 %v875
    %919 = vmatprep.subr.mxu0 0.0
    %920 = vmatpush1.msra.mxu0 0.0
    %921 = vmatprep.subr.mxu0 0.0
    %922 = vmatpush1.msra.mxu0 0.0
    %923 = vmatprep.subr.mxu0 0.0
    %924 = vmatpush1.msra.mxu0 0.0
    %925 = vmatprep.subr.mxu0 0.0
    %926 = vmatpush1.msra.mxu0 0.0
    %927 = vmatprep.subr.mxu0 0.0
    %928 = vmatpush1.msra.mxu0 0.0
    %929 = vmatprep.subr.mxu0 0.0
    %930 = vmatpush1.msra.mxu0 0.0
    %931 = vmatprep.subr.mxu0 0.0
    %932 = vmatpush1.msra.mxu0 0.0
    %933 = vmatprep.subr.mxu0 0.0
    %934 = vmatpush1.msra.mxu0 0.0
    %935 = vmatprep.subr.mxu0 0.0
    %936 = vmatpush1.msra.mxu0 0.0
    %937 = vmatprep.subr.mxu0 0.0
    %938 = vmatpush1.msra.mxu0 0.0
    %939 = vmatprep.subr.mxu0 0.0
    %940 = vmatpush1.msra.mxu0 0.0
    %941 = vmatprep.subr.mxu0 0.0
    %942 = vmatpush1.msra.mxu0 0.0
    %943 = vmatprep.subr.mxu0 0.0
    %944 = vmatpush1.msra.mxu0 0.0
    %945 = vmatprep.subr.mxu0 0.0
    %946 = vmatpush1.msra.mxu0 0.0
    %947 = vmatprep.subr.mxu0 0.0
    %948 = vmatpush1.msra.mxu0 0.0
    %949 = vmatprep.subr.mxu0 0.0
    %950 = vmatpush1.msra.mxu0 0.0
    %951 = vmatprep.mubr.f32.mxu0 0.0
    %952 = vmatmul.mubr.f32.gmra.mrb[0].mxu0 %v876
    %v953 = vpop.f32.mrb[0].mxu0
    %v954 = vadd.f32 %v886, %v953
    %v955 = vpop.f32.mrb[0].mxu0
    %956 = vdwg.mxu0
    %v957 = vsub.f32 0.0, %v954
    %v958 = vmul.f32 %v957, 1.442695
    %v959 = vpow.pop %v958
    %v960 = vadd.f32 %v959, 1.0
    %v961 = vrcp.pop %v960
    %962 = vst [vmem:[#allocation3] sm:$0x1] %v961
    // Predicated region
    $region38: #{tpu_custom_call.1} parent=1 // pred_check
      _
    $region39: #{tpu_custom_call.1} parent=1 // pred_check_branch
      %964 = sbr.rel (0) target = $region41
    $region40: #{tpu_custom_call.1} parent=1 // pred_region
      %s966 = ssub.s32 16, 16
      %967 = vsyncadd [#allocation4], %s966
      %s969 = sshll.u32 [#allocation3], 4
      %s970 = int_to_ptr.vmem [resolvable:$true] %s969
      %972 = dma.vmem_to_hbm [thread:$0]  %s970, 16, %s9, [#allocation4]
    $region41: #{tpu_custom_call.1} parent=1 // pred_fallthru
      _
    // Predicated region
    $region42: #{tpu_custom_call.1} parent=1 // pred_check
      _
    $region43: #{tpu_custom_call.1} parent=1 // pred_check_branch
      %974 = sbr.rel (0) target = $region45
    $region44: #{tpu_custom_call.1} parent=1 // pred_region
      %975 = dma.done [#allocation4], 16
    $region45: #{tpu_custom_call.1} parent=1 // pred_fallthru
      _
    %976 = vsyncpa [#allocation4], 1

</llo_original>
